<compile_context>
chip_gen: v6e
topology: v6e:2x2x1
jax: 0.10.0
libtpu: 0.0.40
codegen_flags: <defaults>
</compile_context>

<pallas_src>
import functools

import jax
import jax.numpy as jnp
from jax.experimental import pallas as pl
from jax.experimental.pallas import tpu as pltpu
from typing import NamedTuple

_LANE = 128
_SUBLANE = 8


def _round_up(x, m):
    return ((x + m - 1) // m) * m


# ---------------------------------------------------------------------------
# One-time hardware / capability queries (cached per process).
# ---------------------------------------------------------------------------
@functools.lru_cache(maxsize=None)
def _vmem_capacity_bytes():
    """Per-core VMEM capacity: 128 MiB on v5e/v6e, 64 MiB on v7x."""
    try:
        return int(pltpu.get_tpu_info().vmem_capacity_bytes)
    except Exception:
        return 64 << 20  # conservative (v7x-sized) fallback if query unavailable


def _probe_kernel(w_ref, o_ref):
    o_ref[...] = w_ref[...]


@functools.lru_cache(maxsize=None)
def _weight_pipeline_mode():
    """One-time capability check: can constant-index blocks be single-buffered
    (pl.Buffered(1))?  Replaces the old per-call broad try/except around the
    real kernel, so genuine lowering errors of the real kernel still surface."""
    if not hasattr(pl, "Buffered"):
        return None
    try:
        call = pl.pallas_call(
            _probe_kernel,
            out_shape=jax.ShapeDtypeStruct((_SUBLANE, _LANE), jnp.float32),
            grid_spec=pltpu.PrefetchScalarGridSpec(
                num_scalar_prefetch=0,
                grid=(2,),
                in_specs=[pl.BlockSpec((_SUBLANE, _LANE), lambda i: (0, 0),
                                       pipeline_mode=pl.Buffered(1))],
                out_specs=pl.BlockSpec((_SUBLANE, _LANE), lambda i: (0, 0)),
            ),
            compiler_params=pltpu.CompilerParams(
                dimension_semantics=("arbitrary",)),
        )
        jax.block_until_ready(call(jnp.zeros((_SUBLANE, _LANE), jnp.float32)))
        return pl.Buffered(1)
    except Exception:
        return None  # fall back to default (double) buffering for weights


# ---------------------------------------------------------------------------
# Kernels
# ---------------------------------------------------------------------------
def mlp_kernel(x_ref, w1_ref, b1_ref, w2_ref, b2_ref, o_ref):
    """Resident-weight path: 1-D grid over batch tiles, both weight matrices
    stay in VMEM for the whole grid."""
    h = jnp.dot(x_ref[...], w1_ref[...], preferred_element_type=jnp.float32)
    h = h + b1_ref[...].astype(jnp.float32)
    h = jnp.maximum(h, 0.1 * h)                 # LeakyReLU(0.1): one VALU op
    if w2_ref.dtype != jnp.float32:             # feed MXU-native bf16 operands
        h = h.astype(w2_ref.dtype)
    out = jnp.dot(h, w2_ref[...], preferred_element_type=jnp.float32)
    o_ref[...] = (out + b2_ref[...].astype(jnp.float32)).astype(o_ref.dtype)


def mlp_kernel_ntiled(x_ref, w1_ref, b1_ref, w2_ref, b2_ref, o_ref, h_ref):
    """Large-latent path: 2-D grid (batch tile, W2 output-lane slab).  The
    layer-1 activation is computed once per batch tile (n-step 0) into an f32
    VMEM scratch and reused for every W2 column slab."""
    @pl.when(pl.program_id(1) == 0)
    def _():
        h = jnp.dot(x_ref[...], w1_ref[...], preferred_element_type=jnp.float32)
        h = h + b1_ref[...].astype(jnp.float32)
        h_ref[...] = jnp.maximum(h, 0.1 * h)

    h = h_ref[...]
    if w2_ref.dtype != jnp.float32:
        h = h.astype(w2_ref.dtype)
    out = jnp.dot(h, w2_ref[...], preferred_element_type=jnp.float32)
    o_ref[...] = (out + b2_ref[...].astype(jnp.float32)).astype(o_ref.dtype)


# ---------------------------------------------------------------------------
# Parameter preparation (padding/downcasting done ONCE, outside the hot path)
# ---------------------------------------------------------------------------
class PreparedParams(NamedTuple):
    w1: jax.Array        # [input_dim, dlat_p]
    b1: jax.Array        # [1, dlat_p]
    w2: jax.Array        # [dlat_p, dlat_p]
    b2: jax.Array        # [1, dlat_p]
    input_dim: int
    latent_dim: int
    dlat_p: int


def prepare_params(w1, b1, w2, b2, *, param_dtype=None):
    """Weights stored [in_features, out_features].  Only the latent (output
    lane) dims are zero-padded to a multiple of 128; padding is exact:
    padded W1 columns get bias 0, LeakyReLU(0)=0, and padded W2 rows multiply
    those zeros, so padded output lanes are 0 and sliced off in the wrapper."""
    input_dim, latent_dim = w1.shape
    dlat_p = _round_up(latent_dim, _LANE)
    b1 = jnp.reshape(b1, (1, latent_dim))
    b2 = jnp.reshape(b2, (1, latent_dim))
    if param_dtype is not None:
        w1, b1, w2, b2 = (a.astype(param_dtype) for a in (w1, b1, w2, b2))
    pad_n = dlat_p - latent_dim
    return PreparedParams(
        jnp.pad(w1, ((0, 0), (0, pad_n))),
        jnp.pad(b1, ((0, 0), (0, pad_n))),
        jnp.pad(w2, ((0, pad_n), (0, pad_n))),
        jnp.pad(b2, ((0, 0), (0, pad_n))),
        int(input_dim), int(latent_dim), int(dlat_p),
    )


# ---------------------------------------------------------------------------
# Tiling heuristics
# ---------------------------------------------------------------------------
def _choose_block_b(batch, din, dlat_p, act_itemsize, resident_bytes,
                    vmem_budget, *, out_cols=None, target_rows=1024):
    """Largest sublane-aligned batch tile <= target_rows such that (a) the
    batch grid has >= 2 steps when batch >= 16 (v7x dual-TC sharding) and (b)
    double-buffered x/out slabs + the f32 h intermediate + resident weights
    fit the VMEM budget."""
    if out_cols is None:
        out_cols = dlat_p
    bb = min(_round_up(batch, _SUBLANE), _round_up(target_rows, _SUBLANE))
    if batch >= 2 * _SUBLANE:
        bb = min(bb, _round_up(pl.cdiv(batch, 2), _SUBLANE))
    per_row = 2 * (din + out_cols) * act_itemsize + dlat_p * 4  # x/out bufs + f32 h
    avail = max(vmem_budget - resident_bytes, 1 << 20)
    while bb > _SUBLANE and bb * per_row > avail:
        bb //= 2
    return max(_SUBLANE, _round_up(bb, _SUBLANE))


def _clamp_block_b(block_b, batch):
    block_b = max(_SUBLANE, _round_up(int(block_b), _SUBLANE))
    return min(block_b, _round_up(batch, _SUBLANE))


# ---------------------------------------------------------------------------
# Cached pallas_call builders (reused across calls with the same config)
# ---------------------------------------------------------------------------
@functools.lru_cache(maxsize=None)
def _build_resident_call(B, block_b, din, dlat_p, x_dtype, w_dtype,
                         vmem_limit_bytes):
    wmode = _weight_pipeline_mode()

    def wspec(shape):
        if wmode is None:
            return pl.BlockSpec(shape, lambda i: (0, 0))
        return pl.BlockSpec(shape, lambda i: (0, 0), pipeline_mode=wmode)

    xsize = jnp.dtype(x_dtype).itemsize
    wsize = jnp.dtype(w_dtype).itemsize
    flops = 2 * B * din * dlat_p + 2 * B * dlat_p * dlat_p
    bytes_accessed = (B * din * xsize + B * dlat_p * xsize
                      + (din * dlat_p + dlat_p * dlat_p + 2 * dlat_p) * wsize)

    return pl.pallas_call(
        mlp_kernel,
        out_shape=jax.ShapeDtypeStruct((B, dlat_p), x_dtype),
        grid_spec=pltpu.PrefetchScalarGridSpec(
            num_scalar_prefetch=0,
            grid=(pl.cdiv(B, block_b),),
            in_specs=[
                pl.BlockSpec((block_b, din), lambda i: (i, 0)),
                wspec((din, dlat_p)),
                wspec((1, dlat_p)),
                wspec((dlat_p, dlat_p)),
                wspec((1, dlat_p)),
            ],
            out_specs=pl.BlockSpec((block_b, dlat_p), lambda i: (i, 0)),
        ),
        compiler_params=pltpu.CompilerParams(
            dimension_semantics=("parallel",),
            vmem_limit_bytes=int(vmem_limit_bytes),
        ),
        cost_estimate=pl.CostEstimate(flops=int(flops), transcendentals=0,
                                      bytes_accessed=int(bytes_accessed)),
    )


@functools.lru_cache(maxsize=None)
def _build_ntiled_call(B, block_b, block_n, din, dlat_p, x_dtype, w_dtype,
                       vmem_limit_bytes):
    wmode = _weight_pipeline_mode()

    def wspec(shape):
        if wmode is None:
            return pl.BlockSpec(shape, lambda i, j: (0, 0))
        return pl.BlockSpec(shape, lambda i, j: (0, 0), pipeline_mode=wmode)

    xsize = jnp.dtype(x_dtype).itemsize
    wsize = jnp.dtype(w_dtype).itemsize
    flops = 2 * B * din * dlat_p + 2 * B * dlat_p * dlat_p
    bytes_accessed = (B * din * xsize + B * dlat_p * xsize
                      + (din * dlat_p + dlat_p * dlat_p + 2 * dlat_p) * wsize)

    return pl.pallas_call(
        mlp_kernel_ntiled,
        out_shape=jax.ShapeDtypeStruct((B, dlat_p), x_dtype),
        grid_spec=pltpu.PrefetchScalarGridSpec(
            num_scalar_prefetch=0,
            grid=(pl.cdiv(B, block_b), pl.cdiv(dlat_p, block_n)),
            in_specs=[
                pl.BlockSpec((block_b, din), lambda i, j: (i, 0)),
                wspec((din, dlat_p)),
                wspec((1, dlat_p)),
                pl.BlockSpec((dlat_p, block_n), lambda i, j: (0, j)),
                pl.BlockSpec((1, block_n), lambda i, j: (0, j)),
            ],
            out_specs=pl.BlockSpec((block_b, block_n), lambda i, j: (i, j)),
            scratch_shapes=[pltpu.VMEM((block_b, dlat_p), jnp.float32)],
        ),
        compiler_params=pltpu.CompilerParams(
            dimension_semantics=("parallel", "arbitrary"),
            vmem_limit_bytes=int(vmem_limit_bytes),
        ),
        cost_estimate=pl.CostEstimate(flops=int(flops), transcendentals=0,
                                      bytes_accessed=int(bytes_accessed)),
    )


# ---------------------------------------------------------------------------
# Forward wrapper
# ---------------------------------------------------------------------------
def mlp_forward(x, params: PreparedParams, *, block_b=None, block_n=None,
                force_n_tiling=False):
    """x: [B, input_dim] -> [B, latent_dim].  `params` from prepare_params()."""
    B, din = x.shape
    assert din == params.input_dim, "x feature dim must match prepared params"
    dlat_p = params.dlat_p
    w_dtype = jnp.dtype(params.w1.dtype)

    # Match operand dtypes so the MXU sees native bf16 x bf16 when the weights
    # were prepared in bf16 (f32 accumulation preserved in the kernel).
    if jnp.dtype(x.dtype) != w_dtype:
        x = x.astype(w_dtype)
    x_dtype = jnp.dtype(x.dtype)
    xsize, wsize = x_dtype.itemsize, w_dtype.itemsize

    vmem_cap = _vmem_capacity_bytes()
    budget = max(vmem_cap - (8 << 20), 16 << 20)  # leave compiler headroom
    n_bufs_w = 1 if _weight_pipeline_mode() is not None else 2
    resident_w = n_bufs_w * (din * dlat_p + dlat_p * dlat_p + 2 * dlat_p) * wsize

    use_n_tiling = force_n_tiling or resident_w > budget // 2

    if not use_n_tiling:
        if block_b is None:
            block_b = _choose_block_b(B, din, dlat_p, xsize, resident_w, budget)
        block_b = _clamp_block_b(block_b, B)
        act_bytes = 2 * block_b * (din + dlat_p) * xsize + block_b * dlat_p * 4
        vmem_limit = min(vmem_cap, max(32 << 20, resident_w + act_bytes + (4 << 20)))
        call = _build_resident_call(B, block_b, din, dlat_p, x_dtype, w_dtype,
                                    vmem_limit)
    else:
        if block_n is None:
            block_n = min(dlat_p, 512)
        block_n = min(max(_LANE, _round_up(int(block_n), _LANE)), dlat_p)

        def _resident(bn):
            # resident W1/b1 + double-buffered W2/b2 column slabs
            return (n_bufs_w * (din + 1) * dlat_p * wsize
                    + 2 * (dlat_p + 1) * bn * wsize)

        while block_n > _LANE and _resident(block_n) > (budget * 3) // 4:
            block_n = max(_LANE, (block_n // 2) // _LANE * _LANE)
        resident = _resident(block_n)

        if block_b is None:
            block_b = _choose_block_b(B, din, dlat_p, xsize, resident, budget,
                                      out_cols=block_n)
        block_b = _clamp_block_b(block_b, B)
        act_bytes = 2 * block_b * (din + block_n) * xsize + block_b * dlat_p * 4
        vmem_limit = min(vmem_cap, max(32 << 20, resident + act_bytes + (4 << 20)))
        call = _build_ntiled_call(B, block_b, block_n, din, dlat_p, x_dtype,
                                  w_dtype, vmem_limit)

    out_p = call(x, params.w1, params.b1, params.w2, params.b2)
    if params.latent_dim == dlat_p:
        return out_p
    return out_p[:, :params.latent_dim]


# ---------------------------------------------------------------------------
# Init + reference
# ---------------------------------------------------------------------------
def init_params(key, input_dim, latent_dim, dtype=jnp.float32):
    """nn.Linear-style uniform(-1/sqrt(fan_in), +) init; weights stored
    [in_features, out_features] (transposed vs PyTorch's [out, in])."""
    k1, k2, k3, k4 = jax.random.split(key, 4)
    bound1 = 1.0 / (input_dim ** 0.5)
    bound2 = 1.0 / (latent_dim ** 0.5)
    w1 = jax.random.uniform(k1, (input_dim, latent_dim), dtype, -bound1, bound1)
    b1 = jax.random.uniform(k2, (1, latent_dim), dtype, -bound1, bound1)
    w2 = jax.random.uniform(k3, (latent_dim, latent_dim), dtype, -bound2, bound2)
    b2 = jax.random.uniform(k4, (1, latent_dim), dtype, -bound2, bound2)
    return w1, b1, w2, b2


def mlp_reference(x, w1, b1, w2, b2):
    hp = jax.lax.Precision.HIGHEST
    h = jnp.dot(x, w1, precision=hp) + b1
    h = jnp.where(h > 0, h, 0.1 * h)
    return jnp.dot(h, w2, precision=hp) + b2


# ---------------------------------------------------------------------------
# Demo / correctness checks
# ---------------------------------------------------------------------------
if __name__ == "__main__":
    key = jax.random.PRNGKey(0)
    kx, kp, kx2, kp2 = jax.random.split(key, 4)

    # ---- Config 1: tiny MLP, f32 params, auto-tiled resident-weight path
    #      (batch=20 -> block_b=16 -> 2 grid steps incl. a ragged tail block).
    batch, input_dim, latent_dim = 20, 32, 32
    x = jax.random.normal(kx, (batch, input_dim), dtype=jnp.float32)
    w1, b1, w2, b2 = init_params(kp, input_dim, latent_dim)
    params_f32 = prepare_params(w1, b1, w2, b2)

    out = jax.block_until_ready(mlp_forward(x, params_f32))
    ref = mlp_reference(x, w1, b1, w2, b2)
    assert out.shape == (batch, latent_dim)
    assert jnp.allclose(out, ref, atol=1e-4, rtol=1e-4), "f32 mismatch"

    # ---- Config 1b: bf16 weights/activations (MXU-native), f32 accumulation.
    params_bf16 = prepare_params(w1, b1, w2, b2, param_dtype=jnp.bfloat16)
    out_bf16 = jax.block_until_ready(mlp_forward(x, params_bf16))
    r = lambda a: a.astype(jnp.bfloat16).astype(jnp.float32)
    ref_bf16 = mlp_reference(r(x), r(w1), r(b1), r(w2), r(b2))
    assert out_bf16.shape == (batch, latent_dim)
    assert jnp.allclose(out_bf16.astype(jnp.float32), ref_bf16,
                        atol=3e-2, rtol=3e-2), "bf16 mismatch"

    # ---- Config 2: force the N-tiled (large-latent) path with small tiles so
    #      the 2-D grid has multiple steps on both axes and the h-scratch reuse
    #      across n-steps is exercised.
    batch2, input_dim2, latent_dim2 = 20, 24, 160
    x2 = jax.random.normal(kx2, (batch2, input_dim2), dtype=jnp.float32)
    p2 = init_params(kp2, input_dim2, latent_dim2)
    params2 = prepare_params(*p2)
    out2 = jax.block_until_ready(
        mlp_forward(x2, params2, block_b=8, block_n=128, force_n_tiling=True))
    ref2 = mlp_reference(x2, *p2)
    assert out2.shape == (batch2, latent_dim2)
    assert jnp.allclose(out2, ref2, atol=1e-4, rtol=1e-4), "n-tiled mismatch"

    print("KERNEL_OK")
</pallas_src>

<mosaic_0001>
module attributes {stable_mosaic.version = 11 : i64} {
  func.func @_probe_kernel(%arg0: i32, %arg1: memref<8x128xf32, #tpu.memory_space<vmem>>, %arg2: memref<8x128xf32, #tpu.memory_space<vmem>>) attributes {dimension_semantics = [#tpu.dimension_semantics<arbitrary>], iteration_bounds = array<i64: 2>, scalar_prefetch = 0 : i64, scratch_operands = 0 : i64, tpu.core_type = #tpu.core_type<tc>, window_params = [{pipeline_mode = #tpu.pipeline_mode<synchronous>, transform_indices = @transform_0, window_bounds = array<i64: 8, 128>}, {pipeline_mode = #tpu.pipeline_mode<synchronous>, transform_indices = @transform_1, window_bounds = array<i64: 8, 128>}]} {
    %c0 = arith.constant 0 : index
    %c0_0 = arith.constant 0 : index
    %0 = vector.load %arg1[%c0, %c0_0] : memref<8x128xf32, #tpu.memory_space<vmem>>, vector<8x128xf32>
    %c0_1 = arith.constant 0 : index
    %c0_2 = arith.constant 0 : index
    %1 = vector.load %arg2[%c0_1, %c0_2] : memref<8x128xf32, #tpu.memory_space<vmem>>, vector<8x128xf32>
    tpu.vector_store %arg2[%c0_1, %c0_2], %0 {strides = array<i32>} : memref<8x128xf32, #tpu.memory_space<vmem>>, vector<8x128xf32>,
    return
  }
  func.func @transform_0(%arg0: i32) -> (i32, i32) {
    %c0_i32 = arith.constant 0 : i32
    %c0_i32_0 = arith.constant 0 : i32
    %c0_i32_1 = arith.constant 0 : i32
    return %c0_i32, %c0_i32_0 : i32, i32
  }
  func.func @transform_1(%arg0: i32) -> (i32, i32) {
    %c0_i32 = arith.constant 0 : i32
    %c0_i32_0 = arith.constant 0 : i32
    %c0_i32_1 = arith.constant 0 : i32
    return %c0_i32, %c0_i32_0 : i32, i32
  }
}

module attributes {stable_mosaic.version = 11 : i64} {
  func.func @mlp_kernel(%arg0: i32, %arg1: memref<16x32xf32, #tpu.memory_space<vmem>>, %arg2: memref<32x128xf32, #tpu.memory_space<vmem>>, %arg3: memref<1x128xf32, #tpu.memory_space<vmem>>, %arg4: memref<128x128xf32, #tpu.memory_space<vmem>>, %arg5: memref<1x128xf32, #tpu.memory_space<vmem>>, %arg6: memref<16x128xf32, #tpu.memory_space<vmem>>) attributes {dimension_semantics = [#tpu.dimension_semantics<parallel>], iteration_bounds = array<i64: 2>, scalar_prefetch = 0 : i64, scratch_operands = 0 : i64, tpu.core_type = #tpu.core_type<tc>, window_params = [{transform_indices = @transform_0, window_bounds = array<i64: 16, 32>}, {pipeline_mode = #tpu.pipeline_mode<synchronous>, transform_indices = @transform_1, window_bounds = array<i64: 32, 128>}, {pipeline_mode = #tpu.pipeline_mode<synchronous>, transform_indices = @transform_2, window_bounds = array<i64: 1, 128>}, {pipeline_mode = #tpu.pipeline_mode<synchronous>, transform_indices = @transform_3, window_bounds = array<i64: 128, 128>}, {pipeline_mode = #tpu.pipeline_mode<synchronous>, transform_indices = @transform_4, window_bounds = array<i64: 1, 128>}, {transform_indices = @transform_5, window_bounds = array<i64: 16, 128>}]} {
    %c0 = arith.constant 0 : index
    %c0_0 = arith.constant 0 : index
    %0 = vector.load %arg1[%c0, %c0_0] : memref<16x32xf32, #tpu.memory_space<vmem>>, vector<16x32xf32>
    %c0_1 = arith.constant 0 : index
    %c0_2 = arith.constant 0 : index
    %1 = vector.load %arg2[%c0_1, %c0_2] : memref<32x128xf32, #tpu.memory_space<vmem>>, vector<32x128xf32>
    %cst = arith.constant dense<0.000000e+00> : vector<16x128xf32>
    %2 = tpu.matmul %0, %1, %cst {dimension_numbers = #tpu.dot_dimension_numbers<[1], [0], [0], [1], [0, 0, 1, 1], [], []>} : vector<16x32xf32>, vector<32x128xf32>, vector<16x128xf32> -> vector<16x128xf32>
    %c0_3 = arith.constant 0 : index
    %c0_4 = arith.constant 0 : index
    %3 = vector.load %arg3[%c0_3, %c0_4] : memref<1x128xf32, #tpu.memory_space<vmem>>, vector<1x128xf32>
    %4 = vector.broadcast %3 : vector<1x128xf32> to vector<16x128xf32>
    %5 = arith.addf %2, %4 : vector<16x128xf32>
    %cst_5 = arith.constant 1.000000e-01 : f32
    %6 = vector.broadcast %cst_5 : f32 to vector<16x128xf32>
    %7 = arith.mulf %6, %5 : vector<16x128xf32>
    %8 = arith.maximumf %5, %7 : vector<16x128xf32>
    %c0_6 = arith.constant 0 : index
    %c0_7 = arith.constant 0 : index
    %9 = vector.load %arg4[%c0_6, %c0_7] : memref<128x128xf32, #tpu.memory_space<vmem>>, vector<128x128xf32>
    %cst_8 = arith.constant dense<0.000000e+00> : vector<16x128xf32>
    %10 = tpu.matmul %8, %9, %cst_8 {dimension_numbers = #tpu.dot_dimension_numbers<[1], [0], [0], [1], [0, 0, 1, 1], [], []>} : vector<16x128xf32>, vector<128x128xf32>, vector<16x128xf32> -> vector<16x128xf32>
    %c0_9 = arith.constant 0 : index
    %c0_10 = arith.constant 0 : index
    %11 = vector.load %arg5[%c0_9, %c0_10] : memref<1x128xf32, #tpu.memory_space<vmem>>, vector<1x128xf32>
    %12 = vector.broadcast %11 : vector<1x128xf32> to vector<16x128xf32>
    %13 = arith.addf %10, %12 : vector<16x128xf32>
    %c0_11 = arith.constant 0 : index
    %c0_12 = arith.constant 0 : index
    %14 = vector.load %arg6[%c0_11, %c0_12] : memref<16x128xf32, #tpu.memory_space<vmem>>, vector<16x128xf32>
    tpu.vector_store %arg6[%c0_11, %c0_12], %13 {strides = array<i32>} : memref<16x128xf32, #tpu.memory_space<vmem>>, vector<16x128xf32>,
    return
  }
  func.func @transform_0(%arg0: i32) -> (i32, i32) {
    %c0_i32 = arith.constant 0 : i32
    %c0_i32_0 = arith.constant 0 : i32
    return %arg0, %c0_i32 : i32, i32
  }
  func.func @transform_1(%arg0: i32) -> (i32, i32) {
    %c0_i32 = arith.constant 0 : i32
    %c0_i32_0 = arith.constant 0 : i32
    %c0_i32_1 = arith.constant 0 : i32
    return %c0_i32, %c0_i32_0 : i32, i32
  }
  func.func @transform_2(%arg0: i32) -> (i32, i32) {
    %c0_i32 = arith.constant 0 : i32
    %c0_i32_0 = arith.constant 0 : i32
    %c0_i32_1 = arith.constant 0 : i32
    return %c0_i32, %c0_i32_0 : i32, i32
  }
  func.func @transform_3(%arg0: i32) -> (i32, i32) {
    %c0_i32 = arith.constant 0 : i32
    %c0_i32_0 = arith.constant 0 : i32
    %c0_i32_1 = arith.constant 0 : i32
    return %c0_i32, %c0_i32_0 : i32, i32
  }
  func.func @transform_4(%arg0: i32) -> (i32, i32) {
    %c0_i32 = arith.constant 0 : i32
    %c0_i32_0 = arith.constant 0 : i32
    %c0_i32_1 = arith.constant 0 : i32
    return %c0_i32, %c0_i32_0 : i32, i32
  }
  func.func @transform_5(%arg0: i32) -> (i32, i32) {
    %c0_i32 = arith.constant 0 : i32
    %c0_i32_0 = arith.constant 0 : i32
    return %arg0, %c0_i32 : i32, i32
  }
}

</mosaic_0001>

<llo_original>
// kernel: tpu_custom_call.1
$region0: #{tpu_custom_call.1}
  #allocation0 [shape = 'u32[]', space=smem, size = 0x4, offset = 0x4, fixed_abs, tag = 'smem constant byte address 0x4 - core index']
  #allocation1 [shape = 'u32[144,128]{1,0:T(1,128)}', space=vmem, size = 0x12000, scoped, tag = 'internal scratch']
  %s0 = inlined_call_operand.hbm [shape: f32[8,128], index: 0, kind: input, shape index: {}]
  %s1 = inlined_call_operand.hbm [shape: f32[8,128], index: 1, kind: output, shape index: {}]
  %s2 = sld [smem:[#allocation0]]
  $region41: #{tpu_custom_call.1} parent=0
    _
  %s4 = ssub.s32 1, %s2
  %s5 = scalar_select 0, %s4, %s2
  $region1: #{tpu_custom_call.1} parent=0
    #allocation2 [shape = 'u8[4096]{0}', space=vmem, size = 0x1000, scoped, tag = 'input window, operand 0, single buffered']
    #allocation3 [shape = 's32[2]{0}', space=sflag, size = 0x8, scoped, tag = 'scoped memory for tpu_custom_call.1']
    #allocation4 [shape = 's32[2]{0}', space=sflag, size = 0x8, scoped, tag = 'scoped memory for tpu_custom_call.1']
    #allocation5 [shape = 'u8[4096]{0}', space=vmem, size = 0x1000, scoped, tag = 'output window, operand 0, single buffered']
    %6 = vsyncpa [#allocation3], 0
    %7 = vsyncpa [#allocation4], 0
    loop: start=0, step=1, limit=4
    $region2: #{tpu_custom_call.1} parent=1 // loop_pre_header
      _
    $region3: #{tpu_custom_call.1} parent=1 // loop_header
      %s9 = sphi 0, %s13
      %p10 = scmp.ge.s32.totalorder %s9, 4
      %s17 = sphi 0, %s17
      %s19 = sphi 0, %s17
      %s20 = sphi 0, %s19
      %s34 = sphi 0, %s20
      %s38 = sphi 0, %s38
      %s40 = sphi 0, %s38
      %s41 = sphi 0, %s40
      %s55 = sphi 0, %s41
    $region4: #{tpu_custom_call.1} parent=1 // loop_header_branch
      %12 = sbr.rel (%p10) target = $region8
    $region5: #{tpu_custom_call.1} parent=1 // loop_body
      %s14 = ssub.s32 %s9, 1
      %s15 = ssub.s32 %s9, 2
      %s16 = sadd.s32 %s9, 1
      %s18 = sadd.s32 %s17, 1
      %p21 = scmp.eq.s32.totalorder %s9, 1
      %p22 = scmp.ne.s32.totalorder %s17, %s19
      %p23 = scmp.eq.s32.totalorder %s9, 0
      %p24 = por %p22, %p23
      %p25 = scmp.ne.s32.totalorder %s17, %s19
      %p26 = scmp.eq.s32.totalorder %s14, 1
      %p27 = por %p25, %p26
      %p28 = scmp.ne.s32.totalorder %s19, %s20
      %p29 = scmp.eq.s32.totalorder %s14, 0
      %p30 = por %p28, %p29
      %p31 = scmp.ne.s32.totalorder %s19, %s20
      %p32 = scmp.eq.s32.totalorder %s15, 1
      %p33 = por %p31, %p32
      %p35 = scmp.ne.s32.totalorder %s20, %s34
      %p36 = scmp.eq.s32.totalorder %s15, 0
      %p37 = por %p35, %p36
      %s39 = sadd.s32 %s38, 1
      %p42 = scmp.eq.s32.totalorder %s9, 1
      %p43 = scmp.ne.s32.totalorder %s38, %s40
      %p44 = scmp.eq.s32.totalorder %s9, 0
      %p45 = por %p43, %p44
      %p46 = scmp.ne.s32.totalorder %s38, %s40
      %p47 = scmp.eq.s32.totalorder %s14, 1
      %p48 = por %p46, %p47
      %p49 = scmp.ne.s32.totalorder %s40, %s41
      %p50 = scmp.eq.s32.totalorder %s14, 0
      %p51 = por %p49, %p50
      %p52 = scmp.ne.s32.totalorder %s40, %s41
      %p53 = scmp.eq.s32.totalorder %s15, 1
      %p54 = por %p52, %p53
      %p56 = scmp.ne.s32.totalorder %s41, %s55
      %p57 = scmp.eq.s32.totalorder %s15, 0
      %p58 = por %p56, %p57
      %p59 = scmp.le.s32.totalorder 1, %s9
      %p60 = scmp.lt.s32.totalorder %s9, 3
      %p61 = pnand %p59, %p60
      %p62 = pneg %p61
      // Predicated region
      $region9: #{tpu_custom_call.1} parent=5 // pred_check
        _
      $region10: #{tpu_custom_call.1} parent=5 // pred_check_branch
        %64 = sbr.rel (%p61) target = $region12
      $region11: #{tpu_custom_call.1} parent=5 // pred_region
        %s65 = ssub.s32 %s9, 1
        // Predicated region
        $region13: #{tpu_custom_call.1} parent=11 // pred_check
          %p66 = pneg %p30
        $region14: #{tpu_custom_call.1} parent=11 // pred_check_branch
          %68 = sbr.rel (%p66) target = $region16
        $region15: #{tpu_custom_call.1} parent=11 // pred_region
          %s70 = ssub.s32 128, 128
          %71 = vsyncadd [#allocation3], %s70
          %s73 = sshll.u32 [#allocation2], 4
          %s74 = int_to_ptr.vmem [resolvable:$true] %s73
          %76 = dma.hbm_to_vmem [thread:$0]  %s0, 128, %s74, [#allocation3]
        $region16: #{tpu_custom_call.1} parent=11 // pred_fallthru
          _
      $region12: #{tpu_custom_call.1} parent=5 // pred_fallthru
        _
      %p77 = scmp.lt.s32.totalorder %s9, 2
      // Predicated region
      $region17: #{tpu_custom_call.1} parent=5 // pred_check
        %p78 = pneg %p77
      $region18: #{tpu_custom_call.1} parent=5 // pred_check_branch
        %80 = sbr.rel (%p78) target = $region20
      $region19: #{tpu_custom_call.1} parent=5 // pred_region
        _
      $region20: #{tpu_custom_call.1} parent=5 // pred_fallthru
        _
      %p81 = scmp.le.s32.totalorder 1, %s9
      %p82 = scmp.lt.s32.totalorder %s9, 3
      %p83 = pnand %p81, %p82
      %p84 = pneg %p83
      // Predicated region
      $region21: #{tpu_custom_call.1} parent=5 // pred_check
        _
      $region22: #{tpu_custom_call.1} parent=5 // pred_check_branch
        %86 = sbr.rel (%p83) target = $region24
      $region23: #{tpu_custom_call.1} parent=5 // pred_region
        %s87 = ssub.s32 %s9, 1
        // Predicated region
        $region25: #{tpu_custom_call.1} parent=23 // pred_check
          %p88 = pneg %p30
        $region26: #{tpu_custom_call.1} parent=23 // pred_check_branch
          %90 = sbr.rel (%p88) target = $region28
        $region27: #{tpu_custom_call.1} parent=23 // pred_region
          %91 = dma.done [#allocation3], 128
        $region28: #{tpu_custom_call.1} parent=23 // pred_fallthru
          _
        %p92 = pneg %p30
        %p93 = pneg %p27
        %p94 = pneg %p51
        %p95 = pneg %p48
        %v96 = vld [vmem:[#allocation2] sm:$0xff]
        %97 = vst [vmem:[#allocation5] sm:$0xff] %v96
        // Predicated region
        $region29: #{tpu_custom_call.1} parent=23 // pred_check
          %p98 = pneg %p48
        $region30: #{tpu_custom_call.1} parent=23 // pred_check_branch
          %100 = sbr.rel (%p98) target = $region32
        $region31: #{tpu_custom_call.1} parent=23 // pred_region
          %s102 = ssub.s32 128, 128
          %103 = vsyncadd [#allocation4], %s102
          %s105 = sshll.u32 [#allocation5], 4
          %s106 = int_to_ptr.vmem [resolvable:$true] %s105
          %108 = dma.vmem_to_hbm [thread:$0]  %s106, 128, %s1, [#allocation4]
        $region32: #{tpu_custom_call.1} parent=23 // pred_fallthru
          _
        // Predicated region
        $region33: #{tpu_custom_call.1} parent=23 // pred_check
          %p109 = pneg %p48
        $region34: #{tpu_custom_call.1} parent=23 // pred_check_branch
          %111 = sbr.rel (%p109) target = $region36
        $region35: #{tpu_custom_call.1} parent=23 // pred_region
          %112 = dma.done [#allocation4], 128
        $region36: #{tpu_custom_call.1} parent=23 // pred_fallthru
          _
      $region24: #{tpu_custom_call.1} parent=5 // pred_fallthru
        _
      %p113 = scmp.le.s32.totalorder 2, %s9
      // Predicated region
      $region37: #{tpu_custom_call.1} parent=5 // pred_check
        %p114 = pneg %p113
      $region38: #{tpu_custom_call.1} parent=5 // pred_check_branch
        %116 = sbr.rel (%p114) target = $region40
      $region39: #{tpu_custom_call.1} parent=5 // pred_region
        %s117 = ssub.s32 %s9, 2
      $region40: #{tpu_custom_call.1} parent=5 // pred_fallthru
        _
    $region6: #{tpu_custom_call.1} parent=1 // loop_footer
      %s13 = sadd.s32 1, %s9
    $region7: #{tpu_custom_call.1} parent=1 // loop_footer_branch
      %8 = sbr.rel target = $region3
    $region8: #{tpu_custom_call.1} parent=1 // loop_exit
      _
    %118 = vsyncpa [#allocation3], 1
    %s119 = scalar_lea.sflag [#allocation3], 1
    %120 = vsyncpa %s119, 1
    %121 = vsyncpa [#allocation4], 1
    %s122 = scalar_lea.sflag [#allocation4], 1
    %123 = vsyncpa %s122, 1

// kernel: tpu_custom_call.1
$region0: #{tpu_custom_call.1}
  #allocation0 [shape = 'u32[]', space=smem, size = 0x4, offset = 0x4, fixed_abs, tag = 'smem constant byte address 0x4 - core index']
  #allocation1 [shape = 'u32[144,128]{1,0:T(1,128)}', space=vmem, size = 0x12000, scoped, tag = 'internal scratch']
  %s0 = inlined_call_operand.hbm [shape: f32[20,32], index: 0, kind: input, shape index: {}]
  %s1 = inlined_call_operand.hbm [shape: f32[32,128], index: 1, kind: input, shape index: {}]
  %s2 = inlined_call_operand.vmem [shape: f32[1,128], index: 2, kind: input, shape index: {}]
  %s3 = inlined_call_operand.hbm [shape: f32[128,128], index: 3, kind: input, shape index: {}]
  %s4 = inlined_call_operand.vmem [shape: f32[1,128], index: 4, kind: input, shape index: {}]
  %s5 = inlined_call_operand.hbm [shape: f32[20,128], index: 5, kind: output, shape index: {}]
  %s6 = sld [smem:[#allocation0]]
  $region65: #{tpu_custom_call.1} parent=0
    _
  %s8 = ssub.s32 1, %s6
  %s9 = scalar_select 0, %s8, %s6
  $region1: #{tpu_custom_call.1} parent=0
    #allocation2 [shape = 'u8[16384]{0}', space=vmem, size = 0x4000, scoped, tag = 'input window, operand 0']
    #allocation3 [shape = 's32[2]{0}', space=sflag, size = 0x8, scoped, tag = 'scoped memory for tpu_custom_call.1']
    #allocation4 [shape = 's32[2]{0}', space=sflag, size = 0x8, scoped, tag = 'scoped memory for tpu_custom_call.1']
    #allocation5 [shape = 'u8[16384]{0}', space=vmem, size = 0x4000, scoped, tag = 'input window, operand 1, single buffered']
    #allocation6 [shape = 's32[1]{0}', space=sflag, size = 0x4, scoped, tag = 'scoped memory for tpu_custom_call.1']
    #allocation7 [shape = 'u8[65536]{0}', space=vmem, size = 0x10000, scoped, tag = 'input window, operand 3, single buffered']
    #allocation8 [shape = 'u8[16384]{0}', space=vmem, size = 0x4000, scoped, tag = 'output window, operand 0']
    %10 = vsyncpa [#allocation3], 0
    %s11 = scalar_lea.sflag [#allocation3], 1
    %12 = vsyncpa %s11, 0
    %13 = vsyncpa [#allocation6], 0
    %14 = vsyncpa [#allocation4], 0
    %s15 = scalar_lea.sflag [#allocation4], 1
    %16 = vsyncpa %s15, 0
    loop: start=0, step=1, limit=4
    $region2: #{tpu_custom_call.1} parent=1 // loop_pre_header
      _
    $region3: #{tpu_custom_call.1} parent=1 // loop_header
      %s18 = sphi 0, %s22
      %p19 = scmp.ge.s32.totalorder %s18, 4
      %s28 = sphi 0, %s30
      %s31 = sphi 0, %s28
      %s32 = sphi 0, %s31
      %s48 = sphi 0, %s32
      %s52 = sphi 0, %s52
      %s54 = sphi 0, %s52
      %s55 = sphi 0, %s54
      %s69 = sphi 0, %s55
      %s73 = sphi 0, %s73
      %s75 = sphi 0, %s73
      %s76 = sphi 0, %s75
      %s90 = sphi 0, %s76
      %s94 = sphi 0, %s94
      %s96 = sphi 0, %s94
      %s97 = sphi 0, %s96
      %s111 = sphi 0, %s97
      %s115 = sphi 0, %s115
      %s117 = sphi 0, %s115
      %s118 = sphi 0, %s117
      %s132 = sphi 0, %s118
      %s138 = sphi 0, %s140
      %s141 = sphi 0, %s138
      %s142 = sphi 0, %s141
      %s158 = sphi 0, %s142
    $region4: #{tpu_custom_call.1} parent=1 // loop_header_branch
      %21 = sbr.rel (%p19) target = $region8
    $region5: #{tpu_custom_call.1} parent=1 // loop_body
      %s23 = ssub.s32 %s18, 1
      %s24 = ssub.s32 %s18, 2
      %s25 = sadd.s32 %s18, 1
      %s26 = ssub.s32 %s18, %s25
      %p27 = scmp.eq.s32.totalorder %s26, 0
      %s29 = sadd.s32 %s28, 1
      %s30 = scalar_select %p27, %s28, %s29
      %p33 = pneg %p27
      %p34 = scmp.eq.s32.totalorder %s18, 1
      %p35 = por %p33, %p34
      %p36 = scmp.ne.s32.totalorder %s28, %s31
      %p37 = scmp.eq.s32.totalorder %s18, 0
      %p38 = por %p36, %p37
      %p39 = scmp.ne.s32.totalorder %s28, %s31
      %p40 = scmp.eq.s32.totalorder %s23, 1
      %p41 = por %p39, %p40
      %p42 = scmp.ne.s32.totalorder %s31, %s32
      %p43 = scmp.eq.s32.totalorder %s23, 0
      %p44 = por %p42, %p43
      %p45 = scmp.ne.s32.totalorder %s31, %s32
      %p46 = scmp.eq.s32.totalorder %s24, 1
      %p47 = por %p45, %p46
      %p49 = scmp.ne.s32.totalorder %s32, %s48
      %p50 = scmp.eq.s32.totalorder %s24, 0
      %p51 = por %p49, %p50
      %s53 = sadd.s32 %s52, 1
      %p56 = scmp.eq.s32.totalorder %s18, 1
      %p57 = scmp.ne.s32.totalorder %s52, %s54
      %p58 = scmp.eq.s32.totalorder %s18, 0
      %p59 = por %p57, %p58
      %p60 = scmp.ne.s32.totalorder %s52, %s54
      %p61 = scmp.eq.s32.totalorder %s23, 1
      %p62 = por %p60, %p61
      %p63 = scmp.ne.s32.totalorder %s54, %s55
      %p64 = scmp.eq.s32.totalorder %s23, 0
      %p65 = por %p63, %p64
      %p66 = scmp.ne.s32.totalorder %s54, %s55
      %p67 = scmp.eq.s32.totalorder %s24, 1
      %p68 = por %p66, %p67
      %p70 = scmp.ne.s32.totalorder %s55, %s69
      %p71 = scmp.eq.s32.totalorder %s24, 0
      %p72 = por %p70, %p71
      %s74 = sadd.s32 %s73, 1
      %p77 = scmp.eq.s32.totalorder %s18, 1
      %p78 = scmp.ne.s32.totalorder %s73, %s75
      %p79 = scmp.eq.s32.totalorder %s18, 0
      %p80 = por %p78, %p79
      %p81 = scmp.ne.s32.totalorder %s73, %s75
      %p82 = scmp.eq.s32.totalorder %s23, 1
      %p83 = por %p81, %p82
      %p84 = scmp.ne.s32.totalorder %s75, %s76
      %p85 = scmp.eq.s32.totalorder %s23, 0
      %p86 = por %p84, %p85
      %p87 = scmp.ne.s32.totalorder %s75, %s76
      %p88 = scmp.eq.s32.totalorder %s24, 1
      %p89 = por %p87, %p88
      %p91 = scmp.ne.s32.totalorder %s76, %s90
      %p92 = scmp.eq.s32.totalorder %s24, 0
      %p93 = por %p91, %p92
      %s95 = sadd.s32 %s94, 1
      %p98 = scmp.eq.s32.totalorder %s18, 1
      %p99 = scmp.ne.s32.totalorder %s94, %s96
      %p100 = scmp.eq.s32.totalorder %s18, 0
      %p101 = por %p99, %p100
      %p102 = scmp.ne.s32.totalorder %s94, %s96
      %p103 = scmp.eq.s32.totalorder %s23, 1
      %p104 = por %p102, %p103
      %p105 = scmp.ne.s32.totalorder %s96, %s97
      %p106 = scmp.eq.s32.totalorder %s23, 0
      %p107 = por %p105, %p106
      %p108 = scmp.ne.s32.totalorder %s96, %s97
      %p109 = scmp.eq.s32.totalorder %s24, 1
      %p110 = por %p108, %p109
      %p112 = scmp.ne.s32.totalorder %s97, %s111
      %p113 = scmp.eq.s32.totalorder %s24, 0
      %p114 = por %p112, %p113
      %s116 = sadd.s32 %s115, 1
      %p119 = scmp.eq.s32.totalorder %s18, 1
      %p120 = scmp.ne.s32.totalorder %s115, %s117
      %p121 = scmp.eq.s32.totalorder %s18, 0
      %p122 = por %p120, %p121
      %p123 = scmp.ne.s32.totalorder %s115, %s117
      %p124 = scmp.eq.s32.totalorder %s23, 1
      %p125 = por %p123, %p124
      %p126 = scmp.ne.s32.totalorder %s117, %s118
      %p127 = scmp.eq.s32.totalorder %s23, 0
      %p128 = por %p126, %p127
      %p129 = scmp.ne.s32.totalorder %s117, %s118
      %p130 = scmp.eq.s32.totalorder %s24, 1
      %p131 = por %p129, %p130
      %p133 = scmp.ne.s32.totalorder %s118, %s132
      %p134 = scmp.eq.s32.totalorder %s24, 0
      %p135 = por %p133, %p134
      %s136 = ssub.s32 %s18, %s25
      %p137 = scmp.eq.s32.totalorder %s136, 0
      %s139 = sadd.s32 %s138, 1
      %s140 = scalar_select %p137, %s138, %s139
      %p143 = pneg %p137
      %p144 = scmp.eq.s32.totalorder %s18, 1
      %p145 = por %p143, %p144
      %p146 = scmp.ne.s32.totalorder %s138, %s141
      %p147 = scmp.eq.s32.totalorder %s18, 0
      %p148 = por %p146, %p147
      %p149 = scmp.ne.s32.totalorder %s138, %s141
      %p150 = scmp.eq.s32.totalorder %s23, 1
      %p151 = por %p149, %p150
      %p152 = scmp.ne.s32.totalorder %s141, %s142
      %p153 = scmp.eq.s32.totalorder %s23, 0
      %p154 = por %p152, %p153
      %p155 = scmp.ne.s32.totalorder %s141, %s142
      %p156 = scmp.eq.s32.totalorder %s24, 1
      %p157 = por %p155, %p156
      %p159 = scmp.ne.s32.totalorder %s142, %s158
      %p160 = scmp.eq.s32.totalorder %s24, 0
      %p161 = por %p159, %p160
      %p162 = scmp.le.s32.totalorder 1, %s18
      %p163 = scmp.lt.s32.totalorder %s18, 3
      %p164 = pnand %p162, %p163
      %p165 = pneg %p164
      // Predicated region
      $region9: #{tpu_custom_call.1} parent=5 // pred_check
        _
      $region10: #{tpu_custom_call.1} parent=5 // pred_check_branch
        %167 = sbr.rel (%p164) target = $region12
      $region11: #{tpu_custom_call.1} parent=5 // pred_region
        %s168 = ssub.s32 %s18, 1
        // Predicated region
        $region13: #{tpu_custom_call.1} parent=11 // pred_check
          %p169 = pneg %p65
        $region14: #{tpu_custom_call.1} parent=11 // pred_check_branch
          %171 = sbr.rel (%p169) target = $region16
        $region15: #{tpu_custom_call.1} parent=11 // pred_region
          %s173 = ssub.s32 512, 512
          %174 = vsyncadd [#allocation6], %s173
          %s175 = sshll.u32 [#allocation5], 4
          %s176 = int_to_ptr.vmem [resolvable:$true] %s175
          %181 = dma.hbm_to_vmem [thread:$0]  %s1, 512, %s176, [#allocation6], 128, 128, 8
        $region16: #{tpu_custom_call.1} parent=11 // pred_fallthru
          _
        // Predicated region
        $region17: #{tpu_custom_call.1} parent=11 // pred_check
          %p182 = pneg %p86
        $region18: #{tpu_custom_call.1} parent=11 // pred_check_branch
          %184 = sbr.rel (%p182) target = $region20
        $region19: #{tpu_custom_call.1} parent=11 // pred_region
          _
        $region20: #{tpu_custom_call.1} parent=11 // pred_fallthru
          _
        // Predicated region
        $region21: #{tpu_custom_call.1} parent=11 // pred_check
          %p185 = pneg %p107
        $region22: #{tpu_custom_call.1} parent=11 // pred_check_branch
          %187 = sbr.rel (%p185) target = $region24
        $region23: #{tpu_custom_call.1} parent=11 // pred_region
          %s189 = ssub.s32 2048, 2048
          %190 = vsyncadd [#allocation6], %s189
          %s191 = sshll.u32 [#allocation7], 4
          %s192 = int_to_ptr.vmem [resolvable:$true] %s191
          %197 = dma.hbm_to_vmem [thread:$0]  %s3, 2048, %s192, [#allocation6], 128, 128, 8
        $region24: #{tpu_custom_call.1} parent=11 // pred_fallthru
          _
        // Predicated region
        $region25: #{tpu_custom_call.1} parent=11 // pred_check
          %p198 = pneg %p128
        $region26: #{tpu_custom_call.1} parent=11 // pred_check_branch
          %200 = sbr.rel (%p198) target = $region28
        $region27: #{tpu_custom_call.1} parent=11 // pred_region
          _
        $region28: #{tpu_custom_call.1} parent=11 // pred_fallthru
          _
      $region12: #{tpu_custom_call.1} parent=5 // pred_fallthru
        _
      %p201 = scmp.lt.s32.totalorder %s18, 2
      // Predicated region
      $region29: #{tpu_custom_call.1} parent=5 // pred_check
        %p202 = pneg %p201
      $region30: #{tpu_custom_call.1} parent=5 // pred_check_branch
        %204 = sbr.rel (%p202) target = $region32
      $region31: #{tpu_custom_call.1} parent=5 // pred_region
        // Predicated region
        $region33: #{tpu_custom_call.1} parent=31 // pred_check
          %p205 = pneg %p38
        $region34: #{tpu_custom_call.1} parent=31 // pred_check_branch
          %207 = sbr.rel (%p205) target = $region36
        $region35: #{tpu_custom_call.1} parent=31 // pred_region
          %s208 = sand.u32 %s28, 1
          %s209 = scalar_lea.sflag [#allocation3], %s208
          %s210 = sand.u32 %s28, 1
          %s211 = smul.addr %s210, 16
          %s212 = scalar_lea.vmem [#allocation2], %s211
          %s213 = smul.u32 2, %s18
          %s214 = ssub.s32 3, %s213
          %p215 = scmp.lt.s32.totalorder %s214, 2
          %s216 = scalar_select %p215, %s214, 2
          %s217 = smul.u32 128, %s216
          %s219 = ssub.s32 256, %s217
          %220 = vsyncadd %s209, %s219
          %p221 = scmp.ne.s32.totalorder 0, %s217
          %s222 = smul.addr %s213, 128
          %s223 = scalar_lea.hbm %s0, %s222
          %s224 = smul.u32 8, %s216
          %s225 = sshll.u32 %s212, 4
          %s226 = int_to_ptr.vmem [resolvable:$true] %s225
          %s227 = sshll.u32 %s224, 4
          %231 = dma.hbm_to_vmem [thread:$0]  (%p221), %s223, %s227, %s226, %s209, 128, 128, 8
        $region36: #{tpu_custom_call.1} parent=31 // pred_fallthru
          _
      $region32: #{tpu_custom_call.1} parent=5 // pred_fallthru
        _
      %p232 = scmp.le.s32.totalorder 1, %s18
      %p233 = scmp.lt.s32.totalorder %s18, 3
      %p234 = pnand %p232, %p233
      %p235 = pneg %p234
      // Predicated region
      $region37: #{tpu_custom_call.1} parent=5 // pred_check
        _
      $region38: #{tpu_custom_call.1} parent=5 // pred_check_branch
        %237 = sbr.rel (%p234) target = $region40
      $region39: #{tpu_custom_call.1} parent=5 // pred_region
        %s238 = ssub.s32 %s18, 1
        %s239 = sand.u32 %s31, 1
        %s240 = scalar_lea.sflag [#allocation3], %s239
        %s241 = sand.u32 %s31, 1
        %s242 = smul.addr %s241, 16
        %s243 = scalar_lea.vmem [#allocation2], %s242
        // Predicated region
        $region41: #{tpu_custom_call.1} parent=39 // pred_check
          %p244 = pneg %p44
        $region42: #{tpu_custom_call.1} parent=39 // pred_check_branch
          %246 = sbr.rel (%p244) target = $region44
        $region43: #{tpu_custom_call.1} parent=39 // pred_region
          %247 = dma.done %s240, 256
        $region44: #{tpu_custom_call.1} parent=39 // pred_fallthru
          _
        // Predicated region
        $region45: #{tpu_custom_call.1} parent=39 // pred_check
          %p248 = pneg %p65
        $region46: #{tpu_custom_call.1} parent=39 // pred_check_branch
          %250 = sbr.rel (%p248) target = $region48
        $region47: #{tpu_custom_call.1} parent=39 // pred_region
          %251 = dma.done [#allocation6], 512
        $region48: #{tpu_custom_call.1} parent=39 // pred_fallthru
          _
        // Predicated region
        $region49: #{tpu_custom_call.1} parent=39 // pred_check
          %p252 = pneg %p107
        $region50: #{tpu_custom_call.1} parent=39 // pred_check_branch
          %254 = sbr.rel (%p252) target = $region52
        $region51: #{tpu_custom_call.1} parent=39 // pred_region
          %255 = dma.done [#allocation6], 2048
        $region52: #{tpu_custom_call.1} parent=39 // pred_fallthru
          _
        %s256 = sand.u32 %s31, 1
        %s257 = scalar_lea.sflag [#allocation3], %s256
        %s258 = sand.u32 %s31, 1
        %s259 = smul.addr %s258, 16
        %s260 = scalar_lea.vmem [#allocation2], %s259
        %p261 = pneg %p44
        %p262 = pneg %p41
        %p263 = pneg %p65
        %p264 = pneg %p62
        %p265 = pneg %p86
        %p266 = pneg %p83
        %p267 = pneg %p107
        %p268 = pneg %p104
        %p269 = pneg %p128
        %p270 = pneg %p125
        %p271 = pneg %p154
        %p272 = pneg %p151
        %s273 = sand.u32 %s141, 1
        %s274 = scalar_lea.sflag [#allocation4], %s273
        %s275 = sand.u32 %s141, 1
        %s276 = smul.addr %s275, 16
        %s277 = scalar_lea.vmem [#allocation8], %s276
        %s278 = smul.u32 2, %s23
        %s279 = ssub.s32 3, %s278
        %p280 = scmp.lt.s32.totalorder %s279, 2
        %s281 = scalar_select %p280, %s279, 2
        %s282 = smul.u32 128, %s281
        %s283 = smul.u32 2, %s23
        %s284 = ssub.s32 3, %s283
        %p285 = scmp.lt.s32.totalorder %s284, 2
        %s286 = scalar_select %p285, %s284, 2
        %s287 = smul.u32 128, %s286
        %v288 = vld [vmem:[%s243] sm:$0xff]
        %v289 = vld [vmem:[%s243 + $0x8] sm:$0xff]
        %v290 = vld [vmem:[#allocation5] sm:$0xff]
        %v291 = vld [vmem:[#allocation5 + $0x8] sm:$0xff]
        %v292 = vld [vmem:[#allocation5 + $0x10] sm:$0xff]
        %v293 = vld [vmem:[#allocation5 + $0x18] sm:$0xff]
        %v294 = vld [vmem:[%s2] sm:$0x1]
        %v296 = vlaneseq
        %v297 = vshrl.u32 %v296, 7
        %v298 = vsub.s32 0, %v297
        %v299 = vrot.slane %v294, %v298
        %vm301 = vcmask 261120
        %v303 = vsel %vm301, %v288, 0
        %v306 = vsel %vm301, %v289, 0
        %308 = vmatprep.subr.mxu0 0.0
        %309 = vmatpush1.msra.mxu0 0.0
        %310 = vmatprep.subr.mxu0 0.0
        %311 = vmatpush1.msra.mxu0 0.0
        %312 = vmatprep.subr.mxu0 0.0
        %313 = vmatpush1.msra.mxu0 0.0
        %314 = vmatprep.subr.mxu0 0.0
        %315 = vmatpush1.msra.mxu0 0.0
        %316 = vmatprep.subr.mxu0 0.0
        %317 = vmatpush1.msra.mxu0 0.0
        %318 = vmatprep.subr.mxu0 0.0
        %319 = vmatpush1.msra.mxu0 0.0
        %320 = vmatprep.subr.mxu0 0.0
        %321 = vmatpush1.msra.mxu0 0.0
        %322 = vmatprep.subr.mxu0 0.0
        %323 = vmatpush1.msra.mxu0 0.0
        %324 = vmatprep.subr.mxu0 0.0
        %325 = vmatpush1.msra.mxu0 0.0
        %326 = vmatprep.subr.mxu0 0.0
        %327 = vmatpush1.msra.mxu0 0.0
        %328 = vmatprep.subr.mxu0 0.0
        %329 = vmatpush1.msra.mxu0 0.0
        %330 = vmatprep.subr.mxu0 0.0
        %331 = vmatpush1.msra.mxu0 0.0
        %332 = vmatprep.subr.mxu0 0.0
        %333 = vmatpush1.msra.mxu0 %v293
        %334 = vmatprep.subr.mxu0 0.0
        %335 = vmatpush1.msra.mxu0 %v292
        %336 = vmatprep.subr.mxu0 0.0
        %337 = vmatpush1.msra.mxu0 %v291
        %338 = vmatprep.subr.mxu0 0.0
        %339 = vmatpush1.msra.mxu0 %v290
        %340 = vmatprep.subr.mxu0 0.0
        %341 = vmatpush2.msra.mxu0 0.0
        %342 = vmatprep.subr.mxu0 0.0
        %343 = vmatpush2.msra.mxu0 0.0
        %344 = vmatprep.subr.mxu0 0.0
        %345 = vmatpush2.msra.mxu0 0.0
        %346 = vmatprep.subr.mxu0 0.0
        %347 = vmatpush2.msra.mxu0 0.0
        %348 = vmatprep.subr.mxu0 0.0
        %349 = vmatpush2.msra.mxu0 0.0
        %350 = vmatprep.subr.mxu0 0.0
        %351 = vmatpush2.msra.mxu0 0.0
        %352 = vmatprep.subr.mxu0 0.0
        %353 = vmatpush2.msra.mxu0 0.0
        %354 = vmatprep.subr.mxu0 0.0
        %355 = vmatpush2.msra.mxu0 0.0
        %356 = vmatprep.subr.mxu0 0.0
        %357 = vmatpush2.msra.mxu0 0.0
        %358 = vmatprep.subr.mxu0 0.0
        %359 = vmatpush2.msra.mxu0 0.0
        %360 = vmatprep.subr.mxu0 0.0
        %361 = vmatpush2.msra.mxu0 0.0
        %362 = vmatprep.subr.mxu0 0.0
        %363 = vmatpush2.msra.mxu0 0.0
        %364 = vmatprep.subr.mxu0 0.0
        %365 = vmatpush2.msra.mxu0 0.0
        %366 = vmatprep.subr.mxu0 0.0
        %367 = vmatpush2.msra.mxu0 0.0
        %368 = vmatprep.subr.mxu0 0.0
        %369 = vmatpush2.msra.mxu0 0.0
        %370 = vmatprep.subr.mxu0 0.0
        %371 = vmatpush2.msra.mxu0 0.0
        %372 = vmatprep.mubr.f32.mxu0 0.0
        %373 = vmatmul.mubr.f32.gmra.mxu0 %v303
        %v374 = vpop.f32.mrf.mxu0
        %v375 = vadd.f32 %v299, %v374
        %v376 = vpop.f32.mrf.mxu0
        %377 = vmatprep.mubr.f32.mxu0 0.0
        %378 = vmatmul.mubr.f32.gmra.mxu0 %v306
        %v379 = vpop.f32.mrf.mxu0
        %v380 = vadd.f32 %v299, %v379
        %v381 = vpop.f32.mrf.mxu0
        %382 = vdwg.mxu0
        %v383 = vmul.f32 %v375, 0.1
        %v384 = vmul.f32 %v380, 0.1
        %v385 = vmax.f32 %v375, %v383
        %v386 = vmax.f32 %v380, %v384
        %v387 = vld [vmem:[#allocation7] sm:$0xff]
        %v388 = vld [vmem:[#allocation7 + $0x8] sm:$0xff]
        %v389 = vld [vmem:[#allocation7 + $0x10] sm:$0xff]
        %v390 = vld [vmem:[#allocation7 + $0x18] sm:$0xff]
        %v391 = vld [vmem:[#allocation7 + $0x20] sm:$0xff]
        %v392 = vld [vmem:[#allocation7 + $0x28] sm:$0xff]
        %v393 = vld [vmem:[#allocation7 + $0x30] sm:$0xff]
        %v394 = vld [vmem:[#allocation7 + $0x38] sm:$0xff]
        %v395 = vld [vmem:[#allocation7 + $0x40] sm:$0xff]
        %v396 = vld [vmem:[#allocation7 + $0x48] sm:$0xff]
        %v397 = vld [vmem:[#allocation7 + $0x50] sm:$0xff]
        %v398 = vld [vmem:[#allocation7 + $0x58] sm:$0xff]
        %v399 = vld [vmem:[#allocation7 + $0x60] sm:$0xff]
        %v400 = vld [vmem:[#allocation7 + $0x68] sm:$0xff]
        %v401 = vld [vmem:[#allocation7 + $0x70] sm:$0xff]
        %v402 = vld [vmem:[#allocation7 + $0x78] sm:$0xff]
        %v403 = vld [vmem:[%s4] sm:$0x1]
        %v405 = vlaneseq
        %v406 = vshrl.u32 %v405, 7
        %v407 = vsub.s32 0, %v406
        %v408 = vrot.slane %v403, %v407
        %410 = vmatprep.subr.mxu0 0.0
        %411 = vmatpush1.msra.mxu0 %v402
        %412 = vmatprep.subr.mxu0 0.0
        %413 = vmatpush1.msra.mxu0 %v401
        %414 = vmatprep.subr.mxu0 0.0
        %415 = vmatpush1.msra.mxu0 %v400
        %416 = vmatprep.subr.mxu0 0.0
        %417 = vmatpush1.msra.mxu0 %v399
        %418 = vmatprep.subr.mxu0 0.0
        %419 = vmatpush1.msra.mxu0 %v398
        %420 = vmatprep.subr.mxu0 0.0
        %421 = vmatpush1.msra.mxu0 %v397
        %422 = vmatprep.subr.mxu0 0.0
        %423 = vmatpush1.msra.mxu0 %v396
        %424 = vmatprep.subr.mxu0 0.0
        %425 = vmatpush1.msra.mxu0 %v395
        %426 = vmatprep.subr.mxu0 0.0
        %427 = vmatpush1.msra.mxu0 %v394
        %428 = vmatprep.subr.mxu0 0.0
        %429 = vmatpush1.msra.mxu0 %v393
        %430 = vmatprep.subr.mxu0 0.0
        %431 = vmatpush1.msra.mxu0 %v392
        %432 = vmatprep.subr.mxu0 0.0
        %433 = vmatpush1.msra.mxu0 %v391
        %434 = vmatprep.subr.mxu0 0.0
        %435 = vmatpush1.msra.mxu0 %v390
        %436 = vmatprep.subr.mxu0 0.0
        %437 = vmatpush1.msra.mxu0 %v389
        %438 = vmatprep.subr.mxu0 0.0
        %439 = vmatpush1.msra.mxu0 %v388
        %440 = vmatprep.subr.mxu0 0.0
        %441 = vmatpush1.msra.mxu0 %v387
        %442 = vmatprep.subr.mxu0 0.0
        %443 = vmatpush2.msra.mxu0 0.0
        %444 = vmatprep.subr.mxu0 0.0
        %445 = vmatpush2.msra.mxu0 0.0
        %446 = vmatprep.subr.mxu0 0.0
        %447 = vmatpush2.msra.mxu0 0.0
        %448 = vmatprep.subr.mxu0 0.0
        %449 = vmatpush2.msra.mxu0 0.0
        %450 = vmatprep.subr.mxu0 0.0
        %451 = vmatpush2.msra.mxu0 0.0
        %452 = vmatprep.subr.mxu0 0.0
        %453 = vmatpush2.msra.mxu0 0.0
        %454 = vmatprep.subr.mxu0 0.0
        %455 = vmatpush2.msra.mxu0 0.0
        %456 = vmatprep.subr.mxu0 0.0
        %457 = vmatpush2.msra.mxu0 0.0
        %458 = vmatprep.subr.mxu0 0.0
        %459 = vmatpush2.msra.mxu0 0.0
        %460 = vmatprep.subr.mxu0 0.0
        %461 = vmatpush2.msra.mxu0 0.0
        %462 = vmatprep.subr.mxu0 0.0
        %463 = vmatpush2.msra.mxu0 0.0
        %464 = vmatprep.subr.mxu0 0.0
        %465 = vmatpush2.msra.mxu0 0.0
        %466 = vmatprep.subr.mxu0 0.0
        %467 = vmatpush2.msra.mxu0 0.0
        %468 = vmatprep.subr.mxu0 0.0
        %469 = vmatpush2.msra.mxu0 0.0
        %470 = vmatprep.subr.mxu0 0.0
        %471 = vmatpush2.msra.mxu0 0.0
        %472 = vmatprep.subr.mxu0 0.0
        %473 = vmatpush2.msra.mxu0 0.0
        %474 = vmatprep.mubr.f32.mxu0 0.0
        %475 = vmatmul.mubr.f32.gmra.mxu0 %v385
        %v476 = vpop.f32.mrf.mxu0
        %v477 = vadd.f32 %v408, %v476
        %v478 = vpop.f32.mrf.mxu0
        %479 = vmatprep.mubr.f32.mxu0 0.0
        %480 = vmatmul.mubr.f32.gmra.mxu0 %v386
        %v481 = vpop.f32.mrf.mxu0
        %v482 = vadd.f32 %v408, %v481
        %v483 = vpop.f32.mrf.mxu0
        %484 = vdwg.mxu0
        %485 = vst [vmem:[%s277] sm:$0xff] %v477
        %486 = vst [vmem:[%s277 + $0x8] sm:$0xff] %v482
        %s487 = sand.u32 %s141, 1
        %s488 = scalar_lea.sflag [#allocation4], %s487
        %s489 = sand.u32 %s141, 1
        %s490 = smul.addr %s489, 16
        %s491 = scalar_lea.vmem [#allocation8], %s490
        // Predicated region
        $region53: #{tpu_custom_call.1} parent=39 // pred_check
          %p492 = pneg %p151
        $region54: #{tpu_custom_call.1} parent=39 // pred_check_branch
          %494 = sbr.rel (%p492) target = $region56
        $region55: #{tpu_custom_call.1} parent=39 // pred_region
          %s495 = smul.u32 2, %s23
          %s496 = ssub.s32 3, %s495
          %p497 = scmp.lt.s32.totalorder %s496, 2
          %s498 = scalar_select %p497, %s496, 2
          %s499 = smul.u32 128, %s498
          %s501 = ssub.s32 256, %s499
          %502 = vsyncadd %s488, %s501
          %p503 = scmp.ne.s32.totalorder 0, %s499
          %s504 = smul.addr %s495, 128
          %s505 = scalar_lea.hbm %s5, %s504
          %s506 = smul.u32 8, %s498
          %s507 = sshll.u32 %s491, 4
          %s508 = int_to_ptr.vmem [resolvable:$true] %s507
          %s509 = sshll.u32 %s506, 4
          %513 = dma.vmem_to_hbm [thread:$0]  (%p503), %s508, %s509, %s505, %s488, 128, 128, 8
        $region56: #{tpu_custom_call.1} parent=39 // pred_fallthru
          _
      $region40: #{tpu_custom_call.1} parent=5 // pred_fallthru
        _
      %p514 = scmp.le.s32.totalorder 2, %s18
      // Predicated region
      $region57: #{tpu_custom_call.1} parent=5 // pred_check
        %p515 = pneg %p514
      $region58: #{tpu_custom_call.1} parent=5 // pred_check_branch
        %517 = sbr.rel (%p515) target = $region60
      $region59: #{tpu_custom_call.1} parent=5 // pred_region
        %s518 = ssub.s32 %s18, 2
        // Predicated region
        $region61: #{tpu_custom_call.1} parent=59 // pred_check
          %p519 = pneg %p157
        $region62: #{tpu_custom_call.1} parent=59 // pred_check_branch
          %521 = sbr.rel (%p519) target = $region64
        $region63: #{tpu_custom_call.1} parent=59 // pred_region
          %s522 = sand.u32 %s142, 1
          %s523 = scalar_lea.sflag [#allocation4], %s522
          %s524 = sand.u32 %s142, 1
          %s525 = smul.addr %s524, 16
          %s526 = scalar_lea.vmem [#allocation8], %s525
          %527 = dma.done %s523, 256
        $region64: #{tpu_custom_call.1} parent=59 // pred_fallthru
          _
      $region60: #{tpu_custom_call.1} parent=5 // pred_fallthru
        _
    $region6: #{tpu_custom_call.1} parent=1 // loop_footer
      %s22 = sadd.s32 1, %s18
    $region7: #{tpu_custom_call.1} parent=1 // loop_footer_branch
      %17 = sbr.rel target = $region3
    $region8: #{tpu_custom_call.1} parent=1 // loop_exit
      _
    %528 = vsyncpa [#allocation3], 1
    %s529 = scalar_lea.sflag [#allocation3], 1
    %530 = vsyncpa %s529, 1
    %531 = vsyncpa [#allocation6], 1
    %532 = vsyncpa [#allocation4], 1
    %s533 = scalar_lea.sflag [#allocation4], 1
    %534 = vsyncpa %s533, 1

</llo_original>
